<compile_context>
chip_gen: v7x
topology: tpu7x:2x2x1
jax: 0.10.0
libtpu: 0.0.40
codegen_flags: <defaults>
</compile_context>

<pallas_src>
import functools

import jax
import jax.numpy as jnp
from jax.experimental import pallas as pl
from jax.experimental.pallas import tpu as pltpu


def _round_up(v, m):
    return ((v + m - 1) // m) * m


def _mlp_relu_k_kernel(x_ref, w1_ref, b1_ref, w2_ref, o_ref, *, k):
    # fc1: [tb, D_pad] @ [D_pad, H_pad] -> [tb, H_pad] on the MXU (f32 acc).
    # Weights were pre-transposed in the wrapper -> plain [M,K]x[K,N].
    h = jnp.dot(x_ref[...], w1_ref[...], preferred_element_type=jnp.float32)
    h = jnp.maximum(h + b1_ref[...], 0.0)            # bias + ReLU on the VPU (f32)

    # ReLU^k via square-and-multiply (k is static -> ~log2(k) vmuls).
    if k == 0:
        p = jnp.ones_like(h)
    else:
        p = None
        base = h
        kk = int(k)
        while kk:
            if kk & 1:
                p = base if p is None else p * base
            kk >>= 1
            if kk:
                base = base * base

    # fc2: [tb, H_pad] @ [H_pad, C_pad] -> [tb, C_pad]; lane-dense output store.
    out = jnp.dot(p.astype(w2_ref.dtype), w2_ref[...],
                  preferred_element_type=jnp.float32)
    o_ref[...] = out.astype(o_ref.dtype)


def _relu_k_mlp_impl(x, w1, b1, w2, *, k, compute_dtype):
    """Pallas forward of the ReLU^k shallow network.

    x : [B, D_in] f32
    w1: [H, D_in]  (fc1.weight, PyTorch layout)
    b1: [H]        (fc1.bias)
    w2: [C, H]     (fc2.weight, bias=False)
    returns [B, C] f32
    """
    B, D_in = x.shape
    H = w1.shape[0]
    C = w2.shape[0]

    cdt = jnp.dtype(compute_dtype)
    itemsize = cdt.itemsize

    D_pad = _round_up(D_in, 128)
    H_pad = _round_up(H, 128)
    C_pad = _round_up(C, 128)

    # One-time (jit-fused) transpose + zero-pad of the parameters.
    w1t = jnp.zeros((D_pad, H_pad), cdt).at[:D_in, :H].set(w1.T.astype(cdt))
    w2t = jnp.zeros((H_pad, C_pad), cdt).at[:H, :C].set(w2.T.astype(cdt))
    b1p = jnp.zeros((1, H_pad), jnp.float32).at[0, :H].set(b1.astype(jnp.float32))

    # Batch tile: biggest tile that keeps resident weights + double-buffered
    # x/out blocks + f32 intermediates inside a conservative VMEM budget.
    row_align = 16 if itemsize < 4 else 8
    resident = 2 * itemsize * (D_pad * H_pad + H_pad * C_pad) + 2 * 4 * H_pad
    budget = 40 << 20
    tile_b = row_align
    for cand in (2048, 1024, 512, 256, 128, 64, 32, 16, 8):
        if cand < row_align:
            continue
        per_tile = 2 * cand * (D_pad + C_pad) * itemsize + 3 * cand * H_pad * 4
        if resident + per_tile <= budget:
            tile_b = cand
            break
    tile_b = min(tile_b, _round_up(B, row_align))

    B_pad = _round_up(B, tile_b)
    x_p = jnp.zeros((B_pad, D_pad), cdt).at[:B, :D_in].set(x.astype(cdt))

    grid = (B_pad // tile_b,)

    needed = (resident
              + 2 * tile_b * (D_pad + C_pad) * itemsize
              + 3 * tile_b * H_pad * 4)
    vmem_limit = int(min(max(2 * needed, 16 << 20), 48 << 20))

    cost = pl.CostEstimate(
        flops=2 * B_pad * D_pad * H_pad + 2 * B_pad * H_pad * C_pad,
        transcendentals=0,
        bytes_accessed=(itemsize * (B_pad * D_pad + D_pad * H_pad + H_pad * C_pad)
                        + 4 * (H_pad + B_pad * C_pad)),
    )

    kernel = functools.partial(_mlp_relu_k_kernel, k=int(k))

    out = pl.pallas_call(
        kernel,
        out_shape=jax.ShapeDtypeStruct((B_pad, C_pad), jnp.float32),
        grid=grid,
        in_specs=[
            pl.BlockSpec((tile_b, D_pad), lambda i: (i, 0)),   # x, streamed over batch
            pl.BlockSpec((D_pad, H_pad), lambda i: (0, 0)),    # fc1.weight^T, resident
            pl.BlockSpec((1, H_pad), lambda i: (0, 0)),        # fc1.bias, resident
            pl.BlockSpec((H_pad, C_pad), lambda i: (0, 0)),    # fc2.weight^T, resident
        ],
        out_specs=pl.BlockSpec((tile_b, C_pad), lambda i: (i, 0)),
        compiler_params=pltpu.CompilerParams(
            dimension_semantics=("parallel",),
            vmem_limit_bytes=vmem_limit,
        ),
        cost_estimate=cost,
    )(x_p, w1t, b1p, w2t)

    # Slice off batch / class padding (fuses under jit).
    return out[:B, :C]


# jit the wrapper so the pad/transpose plumbing fuses and k / compute_dtype are
# compile-time static.
relu_k_mlp = jax.jit(_relu_k_mlp_impl, static_argnames=("k", "compute_dtype"))


def relu_k_mlp_ref(x, w1, b1, w2, k=1):
    """Plain-JAX reference matching the PyTorch forward exactly."""
    h = jnp.maximum(x @ w1.T + b1, 0.0) ** k
    return h @ w2.T


if __name__ == "__main__":
    # Small shapes consistent with model(input_size, hidden_size1, num_classes, k)
    batch = 8
    input_size = 32
    hidden_size1 = 64
    num_classes = 8
    k = 3

    key = jax.random.PRNGKey(0)
    kx, kw1, kb1, kw2 = jax.random.split(key, 4)

    # Deterministic parameter init (mimic PyTorch Linear's uniform fan-in init).
    bound1 = 1.0 / (input_size ** 0.5)
    bound2 = 1.0 / (hidden_size1 ** 0.5)
    x = jax.random.normal(kx, (batch, input_size), dtype=jnp.float32)
    w1 = jax.random.uniform(kw1, (hidden_size1, input_size), jnp.float32, -bound1, bound1)
    b1 = jax.random.uniform(kb1, (hidden_size1,), jnp.float32, -bound1, bound1)
    w2 = jax.random.uniform(kw2, (num_classes, hidden_size1), jnp.float32, -bound2, bound2)

    out = relu_k_mlp(x, w1, b1, w2, k=k, compute_dtype="float32")
    out = jax.block_until_ready(out)

    ref = relu_k_mlp_ref(x, w1, b1, w2, k=k)
    assert out.shape == (batch, num_classes)
    assert jnp.allclose(out, ref, atol=1e-5, rtol=1e-5), "mismatch vs reference"

    print("KERNEL_OK")
</pallas_src>

<mosaic_0001>
module attributes {stable_mosaic.version = 11 : i64} {
  func.func @_mlp_relu_k_kernel(%arg0: i32, %arg1: memref<8x128xf32, #tpu.memory_space<vmem>>, %arg2: memref<128x128xf32, #tpu.memory_space<vmem>>, %arg3: memref<1x128xf32, #tpu.memory_space<vmem>>, %arg4: memref<128x128xf32, #tpu.memory_space<vmem>>, %arg5: memref<8x128xf32, #tpu.memory_space<vmem>>) attributes {dimension_semantics = [#tpu.dimension_semantics<parallel>], iteration_bounds = array<i64: 1>, scalar_prefetch = 0 : i64, scratch_operands = 0 : i64, tpu.core_type = #tpu.core_type<tc>, window_params = [{transform_indices = @transform_0, window_bounds = array<i64: 8, 128>}, {pipeline_mode = #tpu.pipeline_mode<synchronous>, transform_indices = @transform_1, window_bounds = array<i64: 128, 128>}, {pipeline_mode = #tpu.pipeline_mode<synchronous>, transform_indices = @transform_2, window_bounds = array<i64: 1, 128>}, {pipeline_mode = #tpu.pipeline_mode<synchronous>, transform_indices = @transform_3, window_bounds = array<i64: 128, 128>}, {transform_indices = @transform_4, window_bounds = array<i64: 8, 128>}]} {
    %c0 = arith.constant 0 : index
    %c0_0 = arith.constant 0 : index
    %0 = vector.load %arg1[%c0, %c0_0] : memref<8x128xf32, #tpu.memory_space<vmem>>, vector<8x128xf32>
    %c0_1 = arith.constant 0 : index
    %c0_2 = arith.constant 0 : index
    %1 = vector.load %arg2[%c0_1, %c0_2] : memref<128x128xf32, #tpu.memory_space<vmem>>, vector<128x128xf32>
    %cst = arith.constant dense<0.000000e+00> : vector<8x128xf32>
    %2 = tpu.matmul %0, %1, %cst {dimension_numbers = #tpu.dot_dimension_numbers<[1], [0], [0], [1], [0, 0, 1, 1], [], []>} : vector<8x128xf32>, vector<128x128xf32>, vector<8x128xf32> -> vector<8x128xf32>
    %c0_3 = arith.constant 0 : index
    %c0_4 = arith.constant 0 : index
    %3 = vector.load %arg3[%c0_3, %c0_4] : memref<1x128xf32, #tpu.memory_space<vmem>>, vector<1x128xf32>
    %4 = vector.broadcast %3 : vector<1x128xf32> to vector<8x128xf32>
    %5 = arith.addf %2, %4 : vector<8x128xf32>
    %cst_5 = arith.constant 0.000000e+00 : f32
    %6 = vector.broadcast %cst_5 : f32 to vector<8x128xf32>
    %7 = arith.maximumf %5, %6 : vector<8x128xf32>
    %8 = arith.mulf %7, %7 : vector<8x128xf32>
    %9 = arith.mulf %7, %8 : vector<8x128xf32>
    %c0_6 = arith.constant 0 : index
    %c0_7 = arith.constant 0 : index
    %10 = vector.load %arg4[%c0_6, %c0_7] : memref<128x128xf32, #tpu.memory_space<vmem>>, vector<128x128xf32>
    %cst_8 = arith.constant dense<0.000000e+00> : vector<8x128xf32>
    %11 = tpu.matmul %9, %10, %cst_8 {dimension_numbers = #tpu.dot_dimension_numbers<[1], [0], [0], [1], [0, 0, 1, 1], [], []>} : vector<8x128xf32>, vector<128x128xf32>, vector<8x128xf32> -> vector<8x128xf32>
    %c0_9 = arith.constant 0 : index
    %c0_10 = arith.constant 0 : index
    %12 = vector.load %arg5[%c0_9, %c0_10] : memref<8x128xf32, #tpu.memory_space<vmem>>, vector<8x128xf32>
    tpu.vector_store %arg5[%c0_9, %c0_10], %11 {strides = array<i32>} : memref<8x128xf32, #tpu.memory_space<vmem>>, vector<8x128xf32>,
    return
  }
  func.func @transform_0(%arg0: i32) -> (i32, i32) {
    %c0_i32 = arith.constant 0 : i32
    %c0_i32_0 = arith.constant 0 : i32
    return %arg0, %c0_i32 : i32, i32
  }
  func.func @transform_1(%arg0: i32) -> (i32, i32) {
    %c0_i32 = arith.constant 0 : i32
    %c0_i32_0 = arith.constant 0 : i32
    %c0_i32_1 = arith.constant 0 : i32
    return %c0_i32, %c0_i32_0 : i32, i32
  }
  func.func @transform_2(%arg0: i32) -> (i32, i32) {
    %c0_i32 = arith.constant 0 : i32
    %c0_i32_0 = arith.constant 0 : i32
    %c0_i32_1 = arith.constant 0 : i32
    return %c0_i32, %c0_i32_0 : i32, i32
  }
  func.func @transform_3(%arg0: i32) -> (i32, i32) {
    %c0_i32 = arith.constant 0 : i32
    %c0_i32_0 = arith.constant 0 : i32
    %c0_i32_1 = arith.constant 0 : i32
    return %c0_i32, %c0_i32_0 : i32, i32
  }
  func.func @transform_4(%arg0: i32) -> (i32, i32) {
    %c0_i32 = arith.constant 0 : i32
    %c0_i32_0 = arith.constant 0 : i32
    return %arg0, %c0_i32 : i32, i32
  }
}

</mosaic_0001>

<llo_original>
// kernel: _relu_k_mlp_impl.1
$region0: #{_relu_k_mlp_impl.1}
  #allocation0 [shape = 'u32[]', space=smem, size = 0x4, offset = 0x4, fixed_abs, tag = 'smem constant byte address 0x4 - core index']
  #allocation1 [shape = 'u32[144,128]{1,0:T(1,128)}', space=vmem, size = 0x12000, scoped, tag = 'internal scratch']
  %s0 = inlined_call_operand.vmem [shape: f32[8,128], index: 0, kind: input, shape index: {}]
  %s1 = inlined_call_operand.vmem [shape: f32[128,128], index: 1, kind: input, shape index: {}]
  %s2 = inlined_call_operand.vmem [shape: f32[1,128], index: 2, kind: input, shape index: {}]
  %s3 = inlined_call_operand.vmem [shape: f32[128,128], index: 3, kind: input, shape index: {}]
  %s4 = inlined_call_operand.hbm [shape: f32[8,128], index: 4, kind: output, shape index: {}]
  %s5 = sld [smem:[#allocation0]]
  $region26: #{_relu_k_mlp_impl.1} parent=0
    _
  %s7 = ssub.s32 1, %s5
  %s8 = scalar_select 0, %s7, %s5
  $region1: #{_relu_k_mlp_impl.1} parent=0
    #allocation2 [shape = 'u8[4096]{0}', space=vmem, size = 0x1000, scoped, tag = 'output window, operand 0, single buffered']
    #allocation3 [shape = 's32[1]{0}', space=sflag, size = 0x4, scoped, tag = 'scoped memory for _relu_k_mlp_impl.1']
    %9 = vsyncpa [#allocation3], 0
    // Predicated region
    $region2: #{_relu_k_mlp_impl.1} parent=1 // pred_check
      _
    $region3: #{_relu_k_mlp_impl.1} parent=1 // pred_check_branch
      %11 = sbr.rel (0) target = $region5
    $region4: #{_relu_k_mlp_impl.1} parent=1 // pred_region
      _
    $region5: #{_relu_k_mlp_impl.1} parent=1 // pred_fallthru
      _
    // Predicated region
    $region6: #{_relu_k_mlp_impl.1} parent=1 // pred_check
      _
    $region7: #{_relu_k_mlp_impl.1} parent=1 // pred_check_branch
      %13 = sbr.rel (0) target = $region9
    $region8: #{_relu_k_mlp_impl.1} parent=1 // pred_region
      _
    $region9: #{_relu_k_mlp_impl.1} parent=1 // pred_fallthru
      _
    // Predicated region
    $region10: #{_relu_k_mlp_impl.1} parent=1 // pred_check
      _
    $region11: #{_relu_k_mlp_impl.1} parent=1 // pred_check_branch
      %15 = sbr.rel (0) target = $region13
    $region12: #{_relu_k_mlp_impl.1} parent=1 // pred_region
      _
    $region13: #{_relu_k_mlp_impl.1} parent=1 // pred_fallthru
      _
    // Predicated region
    $region14: #{_relu_k_mlp_impl.1} parent=1 // pred_check
      _
    $region15: #{_relu_k_mlp_impl.1} parent=1 // pred_check_branch
      %17 = sbr.rel (0) target = $region17
    $region16: #{_relu_k_mlp_impl.1} parent=1 // pred_region
      _
    $region17: #{_relu_k_mlp_impl.1} parent=1 // pred_fallthru
      _
    %v18 = vld [vmem:[%s0] sm:$0xff]
    %v19 = vld [vmem:[%s1] sm:$0xff]
    %v20 = vld [vmem:[%s1 + $0x8] sm:$0xff]
    %v21 = vld [vmem:[%s1 + $0x10] sm:$0xff]
    %v22 = vld [vmem:[%s1 + $0x18] sm:$0xff]
    %v23 = vld [vmem:[%s1 + $0x20] sm:$0xff]
    %v24 = vld [vmem:[%s1 + $0x28] sm:$0xff]
    %v25 = vld [vmem:[%s1 + $0x30] sm:$0xff]
    %v26 = vld [vmem:[%s1 + $0x38] sm:$0xff]
    %v27 = vld [vmem:[%s1 + $0x40] sm:$0xff]
    %v28 = vld [vmem:[%s1 + $0x48] sm:$0xff]
    %v29 = vld [vmem:[%s1 + $0x50] sm:$0xff]
    %v30 = vld [vmem:[%s1 + $0x58] sm:$0xff]
    %v31 = vld [vmem:[%s1 + $0x60] sm:$0xff]
    %v32 = vld [vmem:[%s1 + $0x68] sm:$0xff]
    %v33 = vld [vmem:[%s1 + $0x70] sm:$0xff]
    %v34 = vld [vmem:[%s1 + $0x78] sm:$0xff]
    %v35 = vld [vmem:[%s2] sm:$0x1]
    %v37 = vlaneseq
    %v38 = vshrl.u32 %v37, 7
    %v39 = vsub.s32 0, %v38
    %v40 = vrot.slane %v35, %v39
    %42 = vmatprep.subr.mxu0 0.0
    %43 = vmatpush1.msra.mxu0 %v19
    %44 = vmatprep.subr.mxu0 0.0
    %45 = vmatpush1.msra.mxu0 %v20
    %46 = vmatprep.subr.mxu0 0.0
    %47 = vmatpush1.msra.mxu0 %v21
    %48 = vmatprep.subr.mxu0 0.0
    %49 = vmatpush1.msra.mxu0 %v22
    %50 = vmatprep.subr.mxu0 0.0
    %51 = vmatpush1.msra.mxu0 %v23
    %52 = vmatprep.subr.mxu0 0.0
    %53 = vmatpush1.msra.mxu0 %v24
    %54 = vmatprep.subr.mxu0 0.0
    %55 = vmatpush1.msra.mxu0 %v25
    %56 = vmatprep.subr.mxu0 0.0
    %57 = vmatpush1.msra.mxu0 %v26
    %58 = vmatprep.subr.mxu0 0.0
    %59 = vmatpush1.msra.mxu0 %v27
    %60 = vmatprep.subr.mxu0 0.0
    %61 = vmatpush1.msra.mxu0 %v28
    %62 = vmatprep.subr.mxu0 0.0
    %63 = vmatpush1.msra.mxu0 %v29
    %64 = vmatprep.subr.mxu0 0.0
    %65 = vmatpush1.msra.mxu0 %v30
    %66 = vmatprep.subr.mxu0 0.0
    %67 = vmatpush1.msra.mxu0 %v31
    %68 = vmatprep.subr.mxu0 0.0
    %69 = vmatpush1.msra.mxu0 %v32
    %70 = vmatprep.subr.mxu0 0.0
    %71 = vmatpush1.msra.mxu0 %v33
    %72 = vmatprep.subr.mxu0 0.0
    %73 = vmatpush1.msra.mxu0 %v34
    %74 = vmatprep.subr.mxu0 0.0
    %75 = vmatpush1.msra.mxu0 0.0
    %76 = vmatprep.subr.mxu0 0.0
    %77 = vmatpush1.msra.mxu0 0.0
    %78 = vmatprep.subr.mxu0 0.0
    %79 = vmatpush1.msra.mxu0 0.0
    %80 = vmatprep.subr.mxu0 0.0
    %81 = vmatpush1.msra.mxu0 0.0
    %82 = vmatprep.subr.mxu0 0.0
    %83 = vmatpush1.msra.mxu0 0.0
    %84 = vmatprep.subr.mxu0 0.0
    %85 = vmatpush1.msra.mxu0 0.0
    %86 = vmatprep.subr.mxu0 0.0
    %87 = vmatpush1.msra.mxu0 0.0
    %88 = vmatprep.subr.mxu0 0.0
    %89 = vmatpush1.msra.mxu0 0.0
    %90 = vmatprep.subr.mxu0 0.0
    %91 = vmatpush1.msra.mxu0 0.0
    %92 = vmatprep.subr.mxu0 0.0
    %93 = vmatpush1.msra.mxu0 0.0
    %94 = vmatprep.subr.mxu0 0.0
    %95 = vmatpush1.msra.mxu0 0.0
    %96 = vmatprep.subr.mxu0 0.0
    %97 = vmatpush1.msra.mxu0 0.0
    %98 = vmatprep.subr.mxu0 0.0
    %99 = vmatpush1.msra.mxu0 0.0
    %100 = vmatprep.subr.mxu0 0.0
    %101 = vmatpush1.msra.mxu0 0.0
    %102 = vmatprep.subr.mxu0 0.0
    %103 = vmatpush1.msra.mxu0 0.0
    %104 = vmatprep.subr.mxu0 0.0
    %105 = vmatpush1.msra.mxu0 0.0
    %106 = vmatprep.mubr.f32.mxu0 0.0
    %107 = vmatmul.mubr.f32.gmra.mrb[0].mxu0 %v18
    %v108 = vpop.f32.mrb[0].mxu0
    %v109 = vadd.f32 %v40, %v108
    %v110 = vpop.f32.mrb[0].mxu0
    %111 = vdwg.mxu0
    %v112 = vmax.f32 %v109, 0.0
    %v113 = vmul.f32 %v112, %v112
    %v114 = vmul.f32 %v112, %v113
    %v115 = vld [vmem:[%s3] sm:$0xff]
    %v116 = vld [vmem:[%s3 + $0x8] sm:$0xff]
    %v117 = vld [vmem:[%s3 + $0x10] sm:$0xff]
    %v118 = vld [vmem:[%s3 + $0x18] sm:$0xff]
    %v119 = vld [vmem:[%s3 + $0x20] sm:$0xff]
    %v120 = vld [vmem:[%s3 + $0x28] sm:$0xff]
    %v121 = vld [vmem:[%s3 + $0x30] sm:$0xff]
    %v122 = vld [vmem:[%s3 + $0x38] sm:$0xff]
    %v123 = vld [vmem:[%s3 + $0x40] sm:$0xff]
    %v124 = vld [vmem:[%s3 + $0x48] sm:$0xff]
    %v125 = vld [vmem:[%s3 + $0x50] sm:$0xff]
    %v126 = vld [vmem:[%s3 + $0x58] sm:$0xff]
    %v127 = vld [vmem:[%s3 + $0x60] sm:$0xff]
    %v128 = vld [vmem:[%s3 + $0x68] sm:$0xff]
    %v129 = vld [vmem:[%s3 + $0x70] sm:$0xff]
    %v130 = vld [vmem:[%s3 + $0x78] sm:$0xff]
    %131 = vmatprep.subr.mxu0 0.0
    %132 = vmatpush1.msra.mxu0 %v115
    %133 = vmatprep.subr.mxu0 0.0
    %134 = vmatpush1.msra.mxu0 %v116
    %135 = vmatprep.subr.mxu0 0.0
    %136 = vmatpush1.msra.mxu0 %v117
    %137 = vmatprep.subr.mxu0 0.0
    %138 = vmatpush1.msra.mxu0 %v118
    %139 = vmatprep.subr.mxu0 0.0
    %140 = vmatpush1.msra.mxu0 %v119
    %141 = vmatprep.subr.mxu0 0.0
    %142 = vmatpush1.msra.mxu0 %v120
    %143 = vmatprep.subr.mxu0 0.0
    %144 = vmatpush1.msra.mxu0 %v121
    %145 = vmatprep.subr.mxu0 0.0
    %146 = vmatpush1.msra.mxu0 %v122
    %147 = vmatprep.subr.mxu0 0.0
    %148 = vmatpush1.msra.mxu0 %v123
    %149 = vmatprep.subr.mxu0 0.0
    %150 = vmatpush1.msra.mxu0 %v124
    %151 = vmatprep.subr.mxu0 0.0
    %152 = vmatpush1.msra.mxu0 %v125
    %153 = vmatprep.subr.mxu0 0.0
    %154 = vmatpush1.msra.mxu0 %v126
    %155 = vmatprep.subr.mxu0 0.0
    %156 = vmatpush1.msra.mxu0 %v127
    %157 = vmatprep.subr.mxu0 0.0
    %158 = vmatpush1.msra.mxu0 %v128
    %159 = vmatprep.subr.mxu0 0.0
    %160 = vmatpush1.msra.mxu0 %v129
    %161 = vmatprep.subr.mxu0 0.0
    %162 = vmatpush1.msra.mxu0 %v130
    %163 = vmatprep.subr.mxu0 0.0
    %164 = vmatpush1.msra.mxu0 0.0
    %165 = vmatprep.subr.mxu0 0.0
    %166 = vmatpush1.msra.mxu0 0.0
    %167 = vmatprep.subr.mxu0 0.0
    %168 = vmatpush1.msra.mxu0 0.0
    %169 = vmatprep.subr.mxu0 0.0
    %170 = vmatpush1.msra.mxu0 0.0
    %171 = vmatprep.subr.mxu0 0.0
    %172 = vmatpush1.msra.mxu0 0.0
    %173 = vmatprep.subr.mxu0 0.0
    %174 = vmatpush1.msra.mxu0 0.0
    %175 = vmatprep.subr.mxu0 0.0
    %176 = vmatpush1.msra.mxu0 0.0
    %177 = vmatprep.subr.mxu0 0.0
    %178 = vmatpush1.msra.mxu0 0.0
    %179 = vmatprep.subr.mxu0 0.0
    %180 = vmatpush1.msra.mxu0 0.0
    %181 = vmatprep.subr.mxu0 0.0
    %182 = vmatpush1.msra.mxu0 0.0
    %183 = vmatprep.subr.mxu0 0.0
    %184 = vmatpush1.msra.mxu0 0.0
    %185 = vmatprep.subr.mxu0 0.0
    %186 = vmatpush1.msra.mxu0 0.0
    %187 = vmatprep.subr.mxu0 0.0
    %188 = vmatpush1.msra.mxu0 0.0
    %189 = vmatprep.subr.mxu0 0.0
    %190 = vmatpush1.msra.mxu0 0.0
    %191 = vmatprep.subr.mxu0 0.0
    %192 = vmatpush1.msra.mxu0 0.0
    %193 = vmatprep.subr.mxu0 0.0
    %194 = vmatpush1.msra.mxu0 0.0
    %195 = vmatprep.mubr.f32.mxu0 0.0
    %196 = vmatmul.mubr.f32.gmra.mrb[0].mxu0 %v114
    %v197 = vpop.f32.mrb[0].mxu0
    %v198 = vadd.f32 0.0, %v197
    %v199 = vpop.f32.mrb[0].mxu0
    %200 = vdwg.mxu0
    %201 = vst [vmem:[#allocation2] sm:$0xff] %v198
    // Predicated region
    $region18: #{_relu_k_mlp_impl.1} parent=1 // pred_check
      _
    $region19: #{_relu_k_mlp_impl.1} parent=1 // pred_check_branch
      %203 = sbr.rel (0) target = $region21
    $region20: #{_relu_k_mlp_impl.1} parent=1 // pred_region
      %s205 = ssub.s32 128, 128
      %206 = vsyncadd [#allocation3], %s205
      %s208 = sshll.u32 [#allocation2], 4
      %s209 = int_to_ptr.vmem [resolvable:$true] %s208
      %211 = dma.vmem_to_hbm [thread:$0]  %s209, 128, %s4, [#allocation3]
    $region21: #{_relu_k_mlp_impl.1} parent=1 // pred_fallthru
      _
    // Predicated region
    $region22: #{_relu_k_mlp_impl.1} parent=1 // pred_check
      _
    $region23: #{_relu_k_mlp_impl.1} parent=1 // pred_check_branch
      %213 = sbr.rel (0) target = $region25
    $region24: #{_relu_k_mlp_impl.1} parent=1 // pred_region
      %214 = dma.done [#allocation3], 128
    $region25: #{_relu_k_mlp_impl.1} parent=1 // pred_fallthru
      _
    %215 = vsyncpa [#allocation3], 1

</llo_original>
